<compile_context>
chip_gen: v7x
topology: tpu7x:2x2x1
jax: 0.10.0
libtpu: 0.0.40
codegen_flags: <defaults>
</compile_context>

<pallas_src>
import jax
import jax.numpy as jnp
from jax import lax
from jax.experimental import pallas as pl
from jax.experimental.pallas import tpu as pltpu


# ---------------------------------------------------------------------------
# Generation-aware hardware parameters.
# ---------------------------------------------------------------------------
def _tpu_generation():
    try:
        kind = jax.devices()[0].device_kind.lower()
    except Exception:
        kind = ""
    # Chips with 2 TensorCores per chip: split the row stream across cores via
    # a leading "parallel" grid axis (per-core partials merged in the wrapper).
    num_cores = 2 if any(g in kind for g in ("v7", "v5p", "v4")) else 1
    try:
        vmem_cap = int(pltpu.get_tpu_info().vmem_capacity_bytes)
    except Exception:
        vmem_cap = (64 if "v7" in kind else 128) * 1024 * 1024
    # ~48 MiB usable on v7x (64 MiB physical), ~96 MiB on v5e/v6e (128 MiB).
    vmem_limit = min((vmem_cap * 3) // 4, 110 * 1024 * 1024)
    return num_cores, vmem_limit


def _choose_tile_rows(n_rows, feat_dim, num_classes, lab_cols,
                      feat_bytes, lab_bytes, vmem_limit, max_tile_rows):
    """VMEM-budget-driven row tile (kernel is HBM-stream bound -> big tiles)."""
    budget = int(vmem_limit * 0.70)                       # compiler headroom
    # fixed: double-buffered (C, D) f32 sums output + small counts/fsq + slack
    fixed = 2 * num_classes * feat_dim * 4 + 4 * (num_classes + feat_dim) * 4 + (64 << 10)
    per_row = 2 * (feat_dim * feat_bytes + lab_cols * lab_bytes)   # dbl-buffered inputs
    tb = max((budget - fixed) // max(per_row, 1), 256)
    tb = min(tb, 4096)                                    # diminishing returns past ~4K
    tb = max((tb // 256) * 256, 256)                      # MXU-contraction / layout friendly
    if max_tile_rows is not None:
        tb = min(tb, max(8, (max_tile_rows // 8) * 8))
    if n_rows <= tb:
        tb = n_rows                                       # single full block (always legal)
    return tb


# ---------------------------------------------------------------------------
# Kernel.
# ---------------------------------------------------------------------------
def _make_affinity_kernel(n_rows, tile_rows, tiles_per_core, num_classes, feat_dim,
                          use_indices, any_tail):
    TB, C, D = tile_rows, num_classes, feat_dim

    def kernel(f_ref, lab_ref, counts_ref, sums_ref, fsq_ref):
        core = pl.program_id(0)
        step = pl.program_id(1)

        @pl.when(step == 0)
        def _init():
            counts_ref[...] = jnp.zeros_like(counts_ref)
            sums_ref[...] = jnp.zeros_like(sums_ref)
            fsq_ref[...] = jnp.zeros_like(fsq_ref)

        # Nominal (unclamped) first row of this tile; dead grid tiles on the last
        # core have row0 >= n_rows and get fully masked below.
        row0 = (core * tiles_per_core + step) * TB

        def one_hot_tile():
            col = lax.broadcasted_iota(jnp.int32, (TB, C), 1)
            if use_indices:
                idx = lab_ref[...].astype(jnp.int32)               # (TB, 1)
                return (col == idx).astype(jnp.float32)
            lab = lab_ref[...].astype(jnp.float32)                 # (TB, C)
            # first-occurrence argmax over classes (matches torch.argmax)
            maxv = jnp.max(lab, axis=1, keepdims=True)
            cand = jnp.where(lab == maxv, col, C)
            lbl = jnp.min(cand, axis=1, keepdims=True)
            return (col == lbl).astype(jnp.float32)

        def accumulate(mask_rows):
            one_hot = one_hot_tile()
            f_raw = f_ref[...]                                     # (TB, D) input dtype
            if mask_rows:
                # Zero out-of-range rows (tail / dead tiles). Masking f_raw keeps
                # NaN/Inf garbage in the OOB tail out of the MXU accumulation.
                row = lax.broadcasted_iota(jnp.int32, (TB, 1), 0) + row0
                valid = row < n_rows
                one_hot = jnp.where(valid, one_hot, 0.0)
                f_raw = jnp.where(valid, f_raw, jnp.zeros_like(f_raw))

            # per-class counts: VPU sublane reduce, stays lane-major as (1, C)
            counts_ref[...] += jnp.sum(one_hot, axis=0, keepdims=True)

            # per-class feature sums: one MXU matmul, contraction over the TB rows
            # (one_hot^T @ f; bf16 inputs hit the bf16 MXU path, f32 accumulate).
            sums_ref[...] += lax.dot_general(
                one_hot.astype(f_raw.dtype), f_raw,
                (((0,), (0,)), ((), ())),
                preferred_element_type=jnp.float32)

            # per-lane partial of sum||f||^2 (sublane reduce only; collapsed to a
            # scalar once, in the wrapper)
            f32 = f_raw.astype(jnp.float32)
            fsq_ref[...] += jnp.sum(f32 * f32, axis=0, keepdims=True)

        if any_tail:
            is_tail = row0 + TB > n_rows

            @pl.when(is_tail)
            def _masked_body():
                accumulate(True)

            @pl.when(jnp.logical_not(is_tail))
            def _fast_body():
                accumulate(False)
        else:
            accumulate(False)

    return kernel


# ---------------------------------------------------------------------------
# Wrapper.
# ---------------------------------------------------------------------------
def affinity_loss(features, labels=None, *, class_indices=None, num_classes=None,
                  max_tile_rows=None):
    """AffinityLoss forward.

    features: (N, D) float.
    labels:   (N, C) float class scores / one-hot (argmax'd in-kernel), OR pass
              `class_indices` (N,) int32 with `num_classes` to skip the dense
              labels entirely (cuts label HBM traffic from N*C*4 to N*4 bytes).
              Note: class_indices must already equal argmax(labels, 1).
    """
    N, D = features.shape
    if class_indices is not None:
        assert num_classes is not None, "num_classes is required with class_indices"
        C = int(num_classes)
        lab = jnp.asarray(class_indices, jnp.int32).reshape(N, 1)
        use_indices = True
    else:
        assert labels is not None and labels.shape[0] == N
        C = labels.shape[1]
        lab = labels
        use_indices = False

    num_cores, vmem_limit = _tpu_generation()
    tb = _choose_tile_rows(N, D, C, lab.shape[1],
                           features.dtype.itemsize, lab.dtype.itemsize,
                           vmem_limit, max_tile_rows)

    total_tiles = pl.cdiv(N, tb)
    num_cores = max(1, min(num_cores, total_tiles))
    tiles_per_core = pl.cdiv(total_tiles, num_cores)
    any_tail = (N % tb != 0) or (num_cores * tiles_per_core != total_tiles)

    def row_block(c, i):
        # Clamp so dead grid points (padded tile count on the last core) never
        # request an out-of-bounds block; their rows are fully masked in-kernel.
        return (jnp.minimum(c * tiles_per_core + i, total_tiles - 1), 0)

    kernel = _make_affinity_kernel(N, tb, tiles_per_core, C, D, use_indices, any_tail)

    counts_p, sums_p, fsq_p = pl.pallas_call(
        kernel,
        out_shape=(
            jax.ShapeDtypeStruct((num_cores, 1, C), jnp.float32),   # per-core counts
            jax.ShapeDtypeStruct((num_cores, C, D), jnp.float32),   # per-core class sums
            jax.ShapeDtypeStruct((num_cores, 1, D), jnp.float32),   # per-core sum||f||^2 (per lane)
        ),
        grid_spec=pltpu.PrefetchScalarGridSpec(
            num_scalar_prefetch=0,
            grid=(num_cores, tiles_per_core),
            in_specs=[
                pl.BlockSpec((tb, D), row_block),
                pl.BlockSpec((tb, lab.shape[1]), row_block),
            ],
            out_specs=[
                pl.BlockSpec((None, 1, C), lambda c, i: (c, 0, 0)),
                pl.BlockSpec((None, C, D), lambda c, i: (c, 0, 0)),
                pl.BlockSpec((None, 1, D), lambda c, i: (c, 0, 0)),
            ],
        ),
        compiler_params=pltpu.CompilerParams(
            # core axis "parallel" (megacore sharding on 2-TC chips); the row-tile
            # axis carries the accumulators -> must stay "arbitrary".
            dimension_semantics=("parallel", "arbitrary"),
            vmem_limit_bytes=int(vmem_limit),
        ),
    )(features, lab)

    # Tiny (C, D) merge of the per-core partials + finalize in plain JAX.
    counts = counts_p.sum(axis=0).reshape(C, 1)                     # (C, 1)
    sums = sums_p.sum(axis=0)                                       # (C, D)
    fsq = fsq_p.sum()                                               # scalar

    mu = jnp.where(counts > 0.0, sums / jnp.maximum(counts, 1.0), 0.0)
    centers = mu + 1e-6                                             # (C, D)

    # intra = sum||f||^2 - 2*sum_c<sums_c, centers_c> + sum_c counts_c*||centers_c||^2
    cross = jnp.sum(sums * centers)
    cnorm = jnp.sum(counts * jnp.sum(centers * centers, axis=1, keepdims=True))
    intra = fsq - 2.0 * cross + cnorm

    center_mean = jnp.mean(centers, axis=0, keepdims=True)          # (1, D)
    inter = jnp.sum((centers - center_mean) ** 2) / jnp.float32(C)
    return intra / (inter + 1e-6)


def affinity_loss_ref(features, labels):
    """Pure-JAX reference mirroring the PyTorch forward exactly."""
    C = labels.shape[1]
    lbl = jnp.argmax(labels, axis=1)
    one_hot = jax.nn.one_hot(lbl, C, dtype=jnp.float32)             # (N, C)
    counts = one_hot.sum(axis=0)[:, None]                           # (C, 1)
    sums = one_hot.T @ features                                     # (C, D)
    centers = jnp.where(counts > 0, sums / jnp.maximum(counts, 1.0), 0.0) + 1e-6
    centers_batch = centers[lbl]                                    # (N, D)
    intra = jnp.sum(jnp.sum((features - centers_batch) ** 2, axis=1))
    center_mean = centers.mean(axis=0, keepdims=True)
    inter = jnp.sum((centers - center_mean) ** 2) / C
    return intra / (inter + 1e-6)


if __name__ == "__main__":
    # AffinityLoss(feature_dim=32, num_classes=4); batch N=8 (smoke test).
    N, D, C = 8, 32, 4
    key = jax.random.PRNGKey(0)
    kf, kl = jax.random.split(key)

    features = jax.random.normal(kf, (N, D), dtype=jnp.float32)
    class_idx = jax.random.randint(kl, (N,), 0, C)
    labels = jax.nn.one_hot(class_idx, C, dtype=jnp.float32)         # (N, C)

    loss = jax.block_until_ready(affinity_loss(features, labels))
    ref = affinity_loss_ref(features, labels)
    assert jnp.allclose(loss, ref, rtol=1e-5, atol=1e-5), (loss, ref)

    # fast path: int32 class indices instead of dense labels (less label HBM traffic)
    loss_idx = jax.block_until_ready(
        affinity_loss(features, class_indices=class_idx, num_classes=C))
    assert jnp.allclose(loss_idx, ref, rtol=1e-5, atol=1e-5), (loss_idx, ref)

    # tiled + masked streaming path (forced small tiles -> multiple grid steps,
    # partial last tile, and per-core partials on 2-TensorCore chips)
    kf2, kl2 = jax.random.split(jax.random.PRNGKey(1))
    N2 = 1000
    features2 = jax.random.normal(kf2, (N2, D), dtype=jnp.float32)
    cls2 = jax.random.randint(kl2, (N2,), 0, C)
    labels2 = jax.nn.one_hot(cls2, C, dtype=jnp.float32)
    loss2 = jax.block_until_ready(
        affinity_loss(features2, labels2, max_tile_rows=256))
    ref2 = affinity_loss_ref(features2, labels2)
    assert jnp.allclose(loss2, ref2, rtol=1e-3, atol=1e-3), (loss2, ref2)

    print("KERNEL_OK")
</pallas_src>

<mosaic_0001>
module attributes {stable_mosaic.version = 11 : i64} {
  func.func @kernel(%arg0: i32, %arg1: i32, %arg2: memref<8x32xf32, #tpu.memory_space<vmem>>, %arg3: memref<8x4xf32, #tpu.memory_space<vmem>>, %arg4: memref<1x1x4xf32, #tpu.memory_space<vmem>>, %arg5: memref<1x4x32xf32, #tpu.memory_space<vmem>>, %arg6: memref<1x1x32xf32, #tpu.memory_space<vmem>>) attributes {dimension_semantics = [#tpu.dimension_semantics<parallel>, #tpu.dimension_semantics<arbitrary>], iteration_bounds = array<i64: 1, 1>, scalar_prefetch = 0 : i64, scratch_operands = 0 : i64, tpu.core_type = #tpu.core_type<tc>, window_params = [{transform_indices = @transform_0, window_bounds = array<i64: 8, 32>}, {transform_indices = @transform_1, window_bounds = array<i64: 8, 4>}, {transform_indices = @transform_2, window_bounds = array<i64: 1, 1, 4>}, {transform_indices = @transform_3, window_bounds = array<i64: 1, 4, 32>}, {transform_indices = @transform_4, window_bounds = array<i64: 1, 1, 32>}]} {
    %c0_i32 = arith.constant 0 : i32
    %0 = arith.cmpi eq, %arg1, %c0_i32 : i32
    %1 = arith.extui %0 : i1 to i32
    %c0_i32_0 = arith.constant 0 : i32
    %2 = arith.cmpi ne, %1, %c0_i32_0 : i32
    scf.if %2 {
      %cst_26 = arith.constant 0.000000e+00 : f32
      %42 = vector.broadcast %cst_26 : f32 to vector<1x4xf32>
      %c0_27 = arith.constant 0 : index
      %c0_28 = arith.constant 0 : index
      %c0_29 = arith.constant 0 : index
      %43 = vector.load %arg4[%c0_27, %c0_28, %c0_29] : memref<1x1x4xf32, #tpu.memory_space<vmem>>, vector<1x1x4xf32>
      %44 = vector.shape_cast %43 : vector<1x1x4xf32> to vector<1x4xf32>
      %45 = vector.shape_cast %42 : vector<1x4xf32> to vector<1x1x4xf32>
      tpu.vector_store %arg4[%c0_27, %c0_28, %c0_29], %45 {strides = array<i32>} : memref<1x1x4xf32, #tpu.memory_space<vmem>>, vector<1x1x4xf32>,
      %cst_30 = arith.constant 0.000000e+00 : f32
      %46 = vector.broadcast %cst_30 : f32 to vector<4x32xf32>
      %c0_31 = arith.constant 0 : index
      %c0_32 = arith.constant 0 : index
      %c0_33 = arith.constant 0 : index
      %47 = vector.load %arg5[%c0_31, %c0_32, %c0_33] : memref<1x4x32xf32, #tpu.memory_space<vmem>>, vector<1x4x32xf32>
      %48 = vector.shape_cast %47 : vector<1x4x32xf32> to vector<4x32xf32>
      %49 = vector.shape_cast %46 : vector<4x32xf32> to vector<1x4x32xf32>
      tpu.vector_store %arg5[%c0_31, %c0_32, %c0_33], %49 {strides = array<i32>} : memref<1x4x32xf32, #tpu.memory_space<vmem>>, vector<1x4x32xf32>,
      %cst_34 = arith.constant 0.000000e+00 : f32
      %50 = vector.broadcast %cst_34 : f32 to vector<1x32xf32>
      %c0_35 = arith.constant 0 : index
      %c0_36 = arith.constant 0 : index
      %c0_37 = arith.constant 0 : index
      %51 = vector.load %arg6[%c0_35, %c0_36, %c0_37] : memref<1x1x32xf32, #tpu.memory_space<vmem>>, vector<1x1x32xf32>
      %52 = vector.shape_cast %51 : vector<1x1x32xf32> to vector<1x32xf32>
      %53 = vector.shape_cast %50 : vector<1x32xf32> to vector<1x1x32xf32>
      tpu.vector_store %arg6[%c0_35, %c0_36, %c0_37], %53 {strides = array<i32>} : memref<1x1x32xf32, #tpu.memory_space<vmem>>, vector<1x1x32xf32>,
    } else {
    }
    %3 = tpu.iota {dimensions = array<i32: 1>} : vector<8x4xi32>
    %c0 = arith.constant 0 : index
    %c0_1 = arith.constant 0 : index
    %4 = vector.load %arg3[%c0, %c0_1] : memref<8x4xf32, #tpu.memory_space<vmem>>, vector<8x4xf32>
    %cst = arith.constant dense<0xFF800000> : vector<8xf32>
    %5 = vector.multi_reduction <maximumf>, %4, %cst [1] : vector<8x4xf32> to vector<8xf32>
    %6 = vector.shape_cast %5 : vector<8xf32> to vector<8x1xf32>
    %7 = vector.broadcast %6 : vector<8x1xf32> to vector<8x4xf32>
    %8 = arith.cmpf oeq, %4, %7 : vector<8x4xf32>
    %c4_i32 = arith.constant 4 : i32
    %9 = vector.broadcast %c4_i32 : i32 to vector<8x4xi32>
    %10 = arith.select %8, %3, %9 : vector<8x4xi1>, vector<8x4xi32>
    %cst_2 = arith.constant dense<2147483647> : vector<8xi32>
    %11 = vector.multi_reduction <minsi>, %10, %cst_2 [1] : vector<8x4xi32> to vector<8xi32>
    %12 = vector.shape_cast %11 : vector<8xi32> to vector<8x1xi32>
    %13 = vector.broadcast %12 : vector<8x1xi32> to vector<8x4xi32>
    %14 = arith.cmpi eq, %3, %13 : vector<8x4xi32>
    %15 = arith.extui %14 : vector<8x4xi1> to vector<8x4xi32>
    %16 = arith.sitofp %15 : vector<8x4xi32> to vector<8x4xf32>
    %c0_3 = arith.constant 0 : index
    %c0_4 = arith.constant 0 : index
    %17 = vector.load %arg2[%c0_3, %c0_4] : memref<8x32xf32, #tpu.memory_space<vmem>>, vector<8x32xf32>
    %c0_5 = arith.constant 0 : index
    %c0_6 = arith.constant 0 : index
    %c0_7 = arith.constant 0 : index
    %18 = vector.load %arg4[%c0_5, %c0_6, %c0_7] : memref<1x1x4xf32, #tpu.memory_space<vmem>>, vector<1x1x4xf32>
    %19 = vector.shape_cast %18 : vector<1x1x4xf32> to vector<1x4xf32>
    %cst_8 = arith.constant dense<0.000000e+00> : vector<4xf32>
    %20 = vector.multi_reduction <add>, %16, %cst_8 [0] : vector<8x4xf32> to vector<4xf32>
    %21 = vector.shape_cast %20 : vector<4xf32> to vector<1x4xf32>
    %22 = arith.addf %19, %21 : vector<1x4xf32>
    %c0_9 = arith.constant 0 : index
    %c0_10 = arith.constant 0 : index
    %c0_11 = arith.constant 0 : index
    %23 = vector.load %arg4[%c0_9, %c0_10, %c0_11] : memref<1x1x4xf32, #tpu.memory_space<vmem>>, vector<1x1x4xf32>
    %24 = vector.shape_cast %23 : vector<1x1x4xf32> to vector<1x4xf32>
    %25 = vector.shape_cast %22 : vector<1x4xf32> to vector<1x1x4xf32>
    tpu.vector_store %arg4[%c0_9, %c0_10, %c0_11], %25 {strides = array<i32>} : memref<1x1x4xf32, #tpu.memory_space<vmem>>, vector<1x1x4xf32>,
    %c0_12 = arith.constant 0 : index
    %c0_13 = arith.constant 0 : index
    %c0_14 = arith.constant 0 : index
    %26 = vector.load %arg5[%c0_12, %c0_13, %c0_14] : memref<1x4x32xf32, #tpu.memory_space<vmem>>, vector<1x4x32xf32>
    %27 = vector.shape_cast %26 : vector<1x4x32xf32> to vector<4x32xf32>
    %cst_15 = arith.constant dense<0.000000e+00> : vector<4x32xf32>
    %28 = tpu.matmul %16, %17, %cst_15 {dimension_numbers = #tpu.dot_dimension_numbers<[0], [0], [1], [1], [0, 1, 1, 1], [], []>} : vector<8x4xf32>, vector<8x32xf32>, vector<4x32xf32> -> vector<4x32xf32>
    %29 = arith.addf %27, %28 : vector<4x32xf32>
    %c0_16 = arith.constant 0 : index
    %c0_17 = arith.constant 0 : index
    %c0_18 = arith.constant 0 : index
    %30 = vector.load %arg5[%c0_16, %c0_17, %c0_18] : memref<1x4x32xf32, #tpu.memory_space<vmem>>, vector<1x4x32xf32>
    %31 = vector.shape_cast %30 : vector<1x4x32xf32> to vector<4x32xf32>
    %32 = vector.shape_cast %29 : vector<4x32xf32> to vector<1x4x32xf32>
    tpu.vector_store %arg5[%c0_16, %c0_17, %c0_18], %32 {strides = array<i32>} : memref<1x4x32xf32, #tpu.memory_space<vmem>>, vector<1x4x32xf32>,
    %c0_19 = arith.constant 0 : index
    %c0_20 = arith.constant 0 : index
    %c0_21 = arith.constant 0 : index
    %33 = vector.load %arg6[%c0_19, %c0_20, %c0_21] : memref<1x1x32xf32, #tpu.memory_space<vmem>>, vector<1x1x32xf32>
    %34 = vector.shape_cast %33 : vector<1x1x32xf32> to vector<1x32xf32>
    %35 = arith.mulf %17, %17 : vector<8x32xf32>
    %cst_22 = arith.constant dense<0.000000e+00> : vector<32xf32>
    %36 = vector.multi_reduction <add>, %35, %cst_22 [0] : vector<8x32xf32> to vector<32xf32>
    %37 = vector.shape_cast %36 : vector<32xf32> to vector<1x32xf32>
    %38 = arith.addf %34, %37 : vector<1x32xf32>
    %c0_23 = arith.constant 0 : index
    %c0_24 = arith.constant 0 : index
    %c0_25 = arith.constant 0 : index
    %39 = vector.load %arg6[%c0_23, %c0_24, %c0_25] : memref<1x1x32xf32, #tpu.memory_space<vmem>>, vector<1x1x32xf32>
    %40 = vector.shape_cast %39 : vector<1x1x32xf32> to vector<1x32xf32>
    %41 = vector.shape_cast %38 : vector<1x32xf32> to vector<1x1x32xf32>
    tpu.vector_store %arg6[%c0_23, %c0_24, %c0_25], %41 {strides = array<i32>} : memref<1x1x32xf32, #tpu.memory_space<vmem>>, vector<1x1x32xf32>,
    return
  }
  func.func @transform_0(%arg0: i32, %arg1: i32) -> (i32, i32) {
    %c1_i32 = arith.constant 1 : i32
    %0 = arith.muli %arg0, %c1_i32 : i32
    %1 = arith.addi %0, %arg1 : i32
    %c0_i32 = arith.constant 0 : i32
    %2 = arith.minsi %1, %c0_i32 : i32
    %c0_i32_0 = arith.constant 0 : i32
    %c0_i32_1 = arith.constant 0 : i32
    return %2, %c0_i32_0 : i32, i32
  }
  func.func @transform_1(%arg0: i32, %arg1: i32) -> (i32, i32) {
    %c1_i32 = arith.constant 1 : i32
    %0 = arith.muli %arg0, %c1_i32 : i32
    %1 = arith.addi %0, %arg1 : i32
    %c0_i32 = arith.constant 0 : i32
    %2 = arith.minsi %1, %c0_i32 : i32
    %c0_i32_0 = arith.constant 0 : i32
    %c0_i32_1 = arith.constant 0 : i32
    return %2, %c0_i32_0 : i32, i32
  }
  func.func @transform_2(%arg0: i32, %arg1: i32) -> (i32, i32, i32) {
    %c0_i32 = arith.constant 0 : i32
    %c0_i32_0 = arith.constant 0 : i32
    %c0_i32_1 = arith.constant 0 : i32
    return %arg0, %c0_i32, %c0_i32_0 : i32, i32, i32
  }
  func.func @transform_3(%arg0: i32, %arg1: i32) -> (i32, i32, i32) {
    %c0_i32 = arith.constant 0 : i32
    %c0_i32_0 = arith.constant 0 : i32
    %c0_i32_1 = arith.constant 0 : i32
    return %arg0, %c0_i32, %c0_i32_0 : i32, i32, i32
  }
  func.func @transform_4(%arg0: i32, %arg1: i32) -> (i32, i32, i32) {
    %c0_i32 = arith.constant 0 : i32
    %c0_i32_0 = arith.constant 0 : i32
    %c0_i32_1 = arith.constant 0 : i32
    return %arg0, %c0_i32, %c0_i32_0 : i32, i32, i32
  }
}

</mosaic_0001>

<llo_original>
// kernel: tpu_custom_call.1
$region0: #{tpu_custom_call.1}
  #allocation0 [shape = 'u32[]', space=smem, size = 0x4, offset = 0x4, fixed_abs, tag = 'smem constant byte address 0x4 - core index']
  #allocation1 [shape = 'u32[144,128]{1,0:T(1,128)}', space=vmem, size = 0x12000, scoped, tag = 'internal scratch']
  %s0 = inlined_call_operand.hbm [shape: f32[8,32], index: 0, kind: input, shape index: {}]
  %s1 = inlined_call_operand.hbm [shape: f32[8,4], index: 1, kind: input, shape index: {}]
  %s2 = inlined_call_operand.hbm [shape: f32[1,1,4], index: 2, kind: output, shape index: {0}]
  %s3 = inlined_call_operand.hbm [shape: f32[1,4,32], index: 3, kind: output, shape index: {1}]
  %s4 = inlined_call_operand.hbm [shape: f32[1,1,32], index: 4, kind: output, shape index: {2}]
  %5 = xla_tuple %s2, %s3, %s4
  %s6 = sld [smem:[#allocation0]]
  $region46: #{tpu_custom_call.1} parent=0
    _
  %s8 = ssub.s32 1, %s6
  %s9 = scalar_select 0, %s8, %s6
  $region1: #{tpu_custom_call.1} parent=0
    #allocation2 [shape = 'u8[4096]{0}', space=vmem, size = 0x1000, scoped, tag = 'input window, operand 0, single buffered']
    #allocation3 [shape = 's32[1]{0}', space=sflag, size = 0x4, scoped, tag = 'scoped memory for tpu_custom_call.1']
    #allocation4 [shape = 's32[1]{0}', space=sflag, size = 0x4, scoped, tag = 'scoped memory for tpu_custom_call.1']
    #allocation5 [shape = 'u8[4096]{0}', space=vmem, size = 0x1000, scoped, tag = 'input window, operand 1, single buffered']
    #allocation6 [shape = 's32[1]{0}', space=sflag, size = 0x4, scoped, tag = 'scoped memory for tpu_custom_call.1']
    #allocation7 [shape = 'u8[512]{0}', space=vmem, size = 0x400, scoped, tag = 'output window, operand 0, single buffered']
    #allocation8 [shape = 'u8[2048]{0}', space=vmem, size = 0x800, scoped, tag = 'output window, operand 1, single buffered']
    #allocation9 [shape = 's32[1]{0}', space=sflag, size = 0x4, scoped, tag = 'scoped memory for tpu_custom_call.1']
    #allocation10 [shape = 'u8[512]{0}', space=vmem, size = 0x400, scoped, tag = 'output window, operand 2, single buffered']
    %10 = vsyncpa [#allocation3], 0
    %11 = vsyncpa [#allocation6], 0
    %12 = vsyncpa [#allocation4], 0
    %13 = vsyncpa [#allocation9], 0
    // Predicated region
    $region2: #{tpu_custom_call.1} parent=1 // pred_check
      _
    $region3: #{tpu_custom_call.1} parent=1 // pred_check_branch
      %15 = sbr.rel (0) target = $region5
    $region4: #{tpu_custom_call.1} parent=1 // pred_region
      %s16 = sadd.s32 0, 0
      %p17 = scmp.lt.s32.totalorder %s16, 0
      %s18 = scalar_select %p17, %s16, 0
      %s20 = ssub.s32 128, 128
      %21 = vsyncadd [#allocation3], %s20
      %s22 = smul.addr %s18, 128
      %s23 = scalar_lea.hbm %s0, %s22
      %s25 = sshll.u32 [#allocation2], 4
      %s26 = int_to_ptr.vmem [resolvable:$true] %s25
      %28 = dma.hbm_to_vmem [thread:$0]  %s23, 128, %s26, [#allocation3]
    $region5: #{tpu_custom_call.1} parent=1 // pred_fallthru
      _
    // Predicated region
    $region6: #{tpu_custom_call.1} parent=1 // pred_check
      _
    $region7: #{tpu_custom_call.1} parent=1 // pred_check_branch
      %30 = sbr.rel (0) target = $region9
    $region8: #{tpu_custom_call.1} parent=1 // pred_region
      %s31 = sadd.s32 0, 0
      %p32 = scmp.lt.s32.totalorder %s31, 0
      %s33 = scalar_select %p32, %s31, 0
      %s35 = ssub.s32 128, 128
      %36 = vsyncadd [#allocation6], %s35
      %s37 = smul.addr %s33, 128
      %s38 = scalar_lea.hbm %s1, %s37
      %s40 = sshll.u32 [#allocation5], 4
      %s41 = int_to_ptr.vmem [resolvable:$true] %s40
      %43 = dma.hbm_to_vmem [thread:$0]  %s38, 128, %s41, [#allocation6]
    $region9: #{tpu_custom_call.1} parent=1 // pred_fallthru
      _
    // Predicated region
    $region10: #{tpu_custom_call.1} parent=1 // pred_check
      _
    $region11: #{tpu_custom_call.1} parent=1 // pred_check_branch
      %45 = sbr.rel (0) target = $region13
    $region12: #{tpu_custom_call.1} parent=1 // pred_region
      %46 = dma.done [#allocation3], 128
    $region13: #{tpu_custom_call.1} parent=1 // pred_fallthru
      _
    // Predicated region
    $region14: #{tpu_custom_call.1} parent=1 // pred_check
      _
    $region15: #{tpu_custom_call.1} parent=1 // pred_check_branch
      %48 = sbr.rel (0) target = $region17
    $region16: #{tpu_custom_call.1} parent=1 // pred_region
      %49 = dma.done [#allocation6], 128
    $region17: #{tpu_custom_call.1} parent=1 // pred_fallthru
      _
    %s50 = sadd.s32 0, 0
    %p51 = scmp.lt.s32.totalorder %s50, 0
    %s52 = scalar_select %p51, %s50, 0
    %s53 = sadd.s32 0, 0
    %p54 = scmp.lt.s32.totalorder %s53, 0
    %s55 = scalar_select %p54, %s53, 0
    %p56 = scmp.eq.s32.totalorder 0, 0
    // Predicated region
    $region18: #{tpu_custom_call.1} parent=1 // pred_check
      %p57 = pneg %p56
    $region19: #{tpu_custom_call.1} parent=1 // pred_check_branch
      %59 = sbr.rel (%p57) target = $region21
    $region20: #{tpu_custom_call.1} parent=1 // pred_region
      %vm60 = vcmask 24576
      %61 = vst.msk [vmem:[#allocation7] sm:$0x1] %vm60, 0.0
      %vm62 = vcmask 257024
      %63 = vst.msk [vmem:[#allocation8] sm:$0xf] %vm62, 0.0
      %vm64 = vcmask 253952
      %65 = vst.msk [vmem:[#allocation10] sm:$0x1] %vm64, 0.0
    $region21: #{tpu_custom_call.1} parent=1 // pred_fallthru
      _
    %v66 = vlaneseq
    %v67 = vand.u32 %v66, 127
    %v68 = vld [vmem:[#allocation5] sm:$0xff]
    %vm69 = vcmask 31744
    %v70 = vsel %vm69, %v68, -inf
    %71 = vmax.xlane.f32.xlu0 %v70
    %v72 = vpop.xlane.xlu0 %71
    %vm73 = vcmp.eq.f32.partialorder %v68, %v72
    %v74 = vsel %vm73, %v67, 4
    %v75 = vsel %vm69, %v74, 2147483647
    %v76 = vand.u32 %v75, 65535
    %v77 = vshra.s32 %v75, 16
    %v78 = vcvt.s32.f32 %v76
    %v79 = vcvt.s32.f32 %v77
    %80 = vmin.xlane.f32.xlu0 %v79
    %v81 = vpop.xlane.xlu0 %80
    %vm82 = vcmp.eq.f32.partialorder %v79, %v81
    %v83 = vsel %vm82, %v78, inf
    %84 = vmin.xlane.f32.xlu0 %v83
    %v85 = vpop.xlane.xlu0 %84
    %v86 = vcvt.f32.s32 %v85
    %v87 = vcvt.f32.s32 %v81
    %v88 = vshll.u32 %v87, 16
    %v89 = vadd.s32 %v88, %v86
    %vm90 = vcmp.eq.s32.totalorder %v67, %v89
    %v91 = vsel %vm90, 1, 0
    %v92 = vcvt.s32.f32 %v91
    %v93 = vld [vmem:[#allocation2] sm:$0xff]
    %v94 = vld [vmem:[#allocation7] sm:$0x1]
    %v95 = vsel %vm69, %v92, 0.0
    %v96 = vrot.slane %v95, 4
    %v97 = vadd.f32 %v95, %v96
    %v98 = vrot.slane %v97, 2
    %v99 = vadd.f32 %v97, %v98
    %v100 = vrot.slane %v99, 1
    %v101 = vadd.f32 %v99, %v100
    %v102 = vadd.f32 %v94, %v101
    %vm103 = vcmask 24576
    %104 = vst.msk [vmem:[#allocation7] sm:$0x1] %vm103, %v102
    %v105 = vld [vmem:[#allocation8] sm:$0xf]
    %106 = vxpose.xlu0.b32.start [1/16] %v92, 128
    %107 = vxpose.xlu0.b32.cont [2/16] 0.0, 128
    %108 = vxpose.xlu0.b32.cont [3/16] 0.0, 128
    %109 = vxpose.xlu0.b32.cont [4/16] 0.0, 128
    %110 = vxpose.xlu0.b32.cont [5/16] 0.0, 128
    %111 = vxpose.xlu0.b32.cont [6/16] 0.0, 128
    %112 = vxpose.xlu0.b32.cont [7/16] 0.0, 128
    %113 = vxpose.xlu0.b32.cont [8/16] 0.0, 128
    %114 = vxpose.xlu0.b32.cont [9/16] 0.0, 128
    %115 = vxpose.xlu0.b32.cont [10/16] 0.0, 128
    %116 = vxpose.xlu0.b32.cont [11/16] 0.0, 128
    %117 = vxpose.xlu0.b32.cont [12/16] 0.0, 128
    %118 = vxpose.xlu0.b32.cont [13/16] 0.0, 128
    %119 = vxpose.xlu0.b32.cont [14/16] 0.0, 128
    %120 = vxpose.xlu0.b32.cont [15/16] 0.0, 128
    %121 = vxpose.xlu0.b32.end [16/16] 0.0, 128
    %v122 = vpop.trf.xlu0
    %v123 = vpop.trf.xlu0
    %v124 = vpop.trf.xlu0
    %v125 = vpop.trf.xlu0
    %v126 = vpop.trf.xlu0
    %v127 = vpop.trf.xlu0
    %v128 = vpop.trf.xlu0
    %v129 = vpop.trf.xlu0
    %v130 = vpop.trf.xlu0
    %v131 = vpop.trf.xlu0
    %v132 = vpop.trf.xlu0
    %v133 = vpop.trf.xlu0
    %v134 = vpop.trf.xlu0
    %v135 = vpop.trf.xlu0
    %v136 = vpop.trf.xlu0
    %v137 = vpop.trf.xlu0
    %vm138 = vcmask 64512
    %v140 = vsel %vm138, %v122, 0
    %142 = vmatprep.subr.mxu0 0.0
    %143 = vmatpush1.msra.mxu0 %v93
    %144 = vmatprep.subr.mxu0 0.0
    %145 = vmatpush1.msra.mxu0 0.0
    %146 = vmatprep.subr.mxu0 0.0
    %147 = vmatpush1.msra.mxu0 0.0
    %148 = vmatprep.subr.mxu0 0.0
    %149 = vmatpush1.msra.mxu0 0.0
    %150 = vmatprep.subr.mxu0 0.0
    %151 = vmatpush1.msra.mxu0 0.0
    %152 = vmatprep.subr.mxu0 0.0
    %153 = vmatpush1.msra.mxu0 0.0
    %154 = vmatprep.subr.mxu0 0.0
    %155 = vmatpush1.msra.mxu0 0.0
    %156 = vmatprep.subr.mxu0 0.0
    %157 = vmatpush1.msra.mxu0 0.0
    %158 = vmatprep.subr.mxu0 0.0
    %159 = vmatpush1.msra.mxu0 0.0
    %160 = vmatprep.subr.mxu0 0.0
    %161 = vmatpush1.msra.mxu0 0.0
    %162 = vmatprep.subr.mxu0 0.0
    %163 = vmatpush1.msra.mxu0 0.0
    %164 = vmatprep.subr.mxu0 0.0
    %165 = vmatpush1.msra.mxu0 0.0
    %166 = vmatprep.subr.mxu0 0.0
    %167 = vmatpush1.msra.mxu0 0.0
    %168 = vmatprep.subr.mxu0 0.0
    %169 = vmatpush1.msra.mxu0 0.0
    %170 = vmatprep.subr.mxu0 0.0
    %171 = vmatpush1.msra.mxu0 0.0
    %172 = vmatprep.subr.mxu0 0.0
    %173 = vmatpush1.msra.mxu0 0.0
    %174 = vmatprep.subr.mxu0 0.0
    %175 = vmatpush1.msra.mxu0 0.0
    %176 = vmatprep.subr.mxu0 0.0
    %177 = vmatpush1.msra.mxu0 0.0
    %178 = vmatprep.subr.mxu0 0.0
    %179 = vmatpush1.msra.mxu0 0.0
    %180 = vmatprep.subr.mxu0 0.0
    %181 = vmatpush1.msra.mxu0 0.0
    %182 = vmatprep.subr.mxu0 0.0
    %183 = vmatpush1.msra.mxu0 0.0
    %184 = vmatprep.subr.mxu0 0.0
    %185 = vmatpush1.msra.mxu0 0.0
    %186 = vmatprep.subr.mxu0 0.0
    %187 = vmatpush1.msra.mxu0 0.0
    %188 = vmatprep.subr.mxu0 0.0
    %189 = vmatpush1.msra.mxu0 0.0
    %190 = vmatprep.subr.mxu0 0.0
    %191 = vmatpush1.msra.mxu0 0.0
    %192 = vmatprep.subr.mxu0 0.0
    %193 = vmatpush1.msra.mxu0 0.0
    %194 = vmatprep.subr.mxu0 0.0
    %195 = vmatpush1.msra.mxu0 0.0
    %196 = vmatprep.subr.mxu0 0.0
    %197 = vmatpush1.msra.mxu0 0.0
    %198 = vmatprep.subr.mxu0 0.0
    %199 = vmatpush1.msra.mxu0 0.0
    %200 = vmatprep.subr.mxu0 0.0
    %201 = vmatpush1.msra.mxu0 0.0
    %202 = vmatprep.subr.mxu0 0.0
    %203 = vmatpush1.msra.mxu0 0.0
    %204 = vmatprep.subr.mxu0 0.0
    %205 = vmatpush1.msra.mxu0 0.0
    %206 = vmatprep.mubr.f32.mxu0 0.0
    %207 = vmatmul.mubr.f32.gmra.mrb[0].mxu0 %v140
    %v208 = vpop.f32.mrb[0].mxu0
    %v209 = vadd.f32 0.0, %v208
    %v210 = vpop.f32.mrb[0].mxu0
    %211 = vdwg.mxu0
    %v212 = vadd.f32 %v105, %v209
    %vm213 = vcmask 257024
    %214 = vst.msk [vmem:[#allocation8] sm:$0xf] %vm213, %v212
    %v215 = vld [vmem:[#allocation10] sm:$0x1]
    %v216 = vmul.f32 %v93, %v93
    %vm217 = vcmask 261120
    %v218 = vsel %vm217, %v216, 0.0
    %v219 = vrot.slane %v218, 4
    %v220 = vadd.f32 %v218, %v219
    %v221 = vrot.slane %v220, 2
    %v222 = vadd.f32 %v220, %v221
    %v223 = vrot.slane %v222, 1
    %v224 = vadd.f32 %v222, %v223
    %v225 = vadd.f32 %v215, %v224
    %vm226 = vcmask 253952
    %227 = vst.msk [vmem:[#allocation10] sm:$0x1] %vm226, %v225
    // Predicated region
    $region22: #{tpu_custom_call.1} parent=1 // pred_check
      _
    $region23: #{tpu_custom_call.1} parent=1 // pred_check_branch
      %229 = sbr.rel (0) target = $region25
    $region24: #{tpu_custom_call.1} parent=1 // pred_region
      %s231 = ssub.s32 16, 16
      %232 = vsyncadd [#allocation4], %s231
      %s234 = sshll.u32 [#allocation7], 4
      %s235 = int_to_ptr.vmem [resolvable:$true] %s234
      %237 = dma.vmem_to_hbm [thread:$0]  %s235, 16, %s2, [#allocation4]
    $region25: #{tpu_custom_call.1} parent=1 // pred_fallthru
      _
    // Predicated region
    $region26: #{tpu_custom_call.1} parent=1 // pred_check
      _
    $region27: #{tpu_custom_call.1} parent=1 // pred_check_branch
      %239 = sbr.rel (0) target = $region29
    $region28: #{tpu_custom_call.1} parent=1 // pred_region
      %s241 = ssub.s32 64, 64
      %242 = vsyncadd [#allocation9], %s241
      %s244 = sshll.u32 [#allocation8], 4
      %s245 = int_to_ptr.vmem [resolvable:$true] %s244
      %247 = dma.vmem_to_hbm [thread:$0]  %s245, 64, %s3, [#allocation9]
    $region29: #{tpu_custom_call.1} parent=1 // pred_fallthru
      _
    // Predicated region
    $region30: #{tpu_custom_call.1} parent=1 // pred_check
      _
    $region31: #{tpu_custom_call.1} parent=1 // pred_check_branch
      %249 = sbr.rel (0) target = $region33
    $region32: #{tpu_custom_call.1} parent=1 // pred_region
      %s251 = ssub.s32 16, 16
      %252 = vsyncadd [#allocation9], %s251
      %s254 = sshll.u32 [#allocation10], 4
      %s255 = int_to_ptr.vmem [resolvable:$true] %s254
      %257 = dma.vmem_to_hbm [thread:$0]  %s255, 16, %s4, [#allocation9]
    $region33: #{tpu_custom_call.1} parent=1 // pred_fallthru
      _
    // Predicated region
    $region34: #{tpu_custom_call.1} parent=1 // pred_check
      _
    $region35: #{tpu_custom_call.1} parent=1 // pred_check_branch
      %259 = sbr.rel (0) target = $region37
    $region36: #{tpu_custom_call.1} parent=1 // pred_region
      %260 = dma.done [#allocation4], 16
    $region37: #{tpu_custom_call.1} parent=1 // pred_fallthru
      _
    // Predicated region
    $region38: #{tpu_custom_call.1} parent=1 // pred_check
      _
    $region39: #{tpu_custom_call.1} parent=1 // pred_check_branch
      %262 = sbr.rel (0) target = $region41
    $region40: #{tpu_custom_call.1} parent=1 // pred_region
      %263 = dma.done [#allocation9], 64
    $region41: #{tpu_custom_call.1} parent=1 // pred_fallthru
      _
    // Predicated region
    $region42: #{tpu_custom_call.1} parent=1 // pred_check
      _
    $region43: #{tpu_custom_call.1} parent=1 // pred_check_branch
      %265 = sbr.rel (0) target = $region45
    $region44: #{tpu_custom_call.1} parent=1 // pred_region
      %266 = dma.done [#allocation9], 16
    $region45: #{tpu_custom_call.1} parent=1 // pred_fallthru
      _
    %267 = vsyncpa [#allocation3], 1
    %268 = vsyncpa [#allocation6], 1
    %269 = vsyncpa [#allocation4], 1
    %270 = vsyncpa [#allocation9], 1

</llo_original>
